<compile_context>
chip_gen: v7x
topology: tpu7x:2x2x1
jax: 0.10.0
libtpu: 0.0.40
codegen_flags: <defaults>
</compile_context>

<pallas_src>
import functools

import jax
import jax.numpy as jnp
from jax import lax
from jax.experimental import pallas as pl
from jax.experimental.pallas import tpu as pltpu

_LANE = 128             # lane tile (last dim)
_ROW_ALIGN = 32         # int8 native tile is (32, 128) -> keep rows a multiple of 32
_MAX_BLOCK_ROWS = 2048  # (2048, 128) int8 block = 256 KiB out; int32 temps ~ few MiB
_VMEM_LIMIT = 32 * 1024 * 1024  # explicit scoped-VMEM allowance (safe on v5e/v6e/v7x)


def _i32(v):
    """Python int -> wrapped signed 32-bit constant."""
    v &= 0xFFFFFFFF
    if v >= 0x80000000:
        v -= 0x100000000
    return jnp.int32(v)


def _round_up(v, m):
    return ((v + m - 1) // m) * m


def _fmix32_u32(x):
    """murmur3 32-bit finalizer on uint32 (logical shifts)."""
    x = x ^ (x >> 16)
    x = x * jnp.uint32(0x85EBCA6B)
    x = x ^ (x >> 13)
    x = x * jnp.uint32(0xC2B2AE35)
    x = x ^ (x >> 16)
    return x


def _dropout_mask_kernel(seed_ref, mask_ref, *, threshold):
    """Writes an int8 mask per complex element: bit0 = keep_real, bit1 = keep_imag."""
    blk, lanes = mask_ref.shape

    # Global element index of every element in this tile (counter-based RNG).
    base = pl.program_id(0) * (blk * lanes)
    gidx = (base
            + lax.broadcasted_iota(jnp.int32, (blk, lanes), 0) * lanes
            + lax.broadcasted_iota(jnp.int32, (blk, lanes), 1))

    # Mix the call seed so nearby seeds give unrelated streams, then avalanche.
    s_mix = seed_ref[0] * _i32(0x9E3779B1)
    bits = _fmix32_u32(pltpu.bitcast(gidx ^ s_mix, jnp.uint32))

    # One hash per complex element; disjoint 16-bit halves drive the two planes.
    # Values are < 2^16, so bitcast to int32 and use a signed compare.
    hi = pltpu.bitcast(bits >> 16, jnp.int32)                  # real-plane bits
    lo = pltpu.bitcast(bits & jnp.uint32(0xFFFF), jnp.int32)   # imag-plane bits
    thr = jnp.int32(threshold)                                 # keep iff bits >= thr
    keep_r = hi >= thr
    keep_i = lo >= thr

    m = (jnp.where(keep_r, jnp.int32(1), jnp.int32(0))
         + jnp.where(keep_i, jnp.int32(2), jnp.int32(0)))
    mask_ref[...] = m.astype(jnp.int8)


@functools.partial(jax.jit, static_argnames=("p", "training"))
def complex_dropout(x, p=0.5, seed=0, training=True):
    """ComplexDropout forward. x: complex64 array of any shape."""
    x = jnp.asarray(x).astype(jnp.complex64)
    if (not training) or p == 0.0:
        return x
    if p >= 1.0:  # torch.nn.Dropout(p=1) zeroes everything
        return jnp.zeros_like(x)

    orig_shape = x.shape
    total = int(x.size)
    if total == 0:
        return x

    # --- tiling (all Python ints; no data copies involved, only the mask pads) ---
    rows = pl.cdiv(total, _LANE)
    if rows <= 64:
        blk = _round_up(rows, _ROW_ALIGN)     # single full-array block (tiny case)
        grid_n = 1
    else:
        # >= ~4 grid steps so v7x megacore gets both TCs busy and DMA pipelines;
        # cap block at _MAX_BLOCK_ROWS to amortize per-step overhead.
        blk = min(_MAX_BLOCK_ROWS, _round_up(pl.cdiv(rows, 4), _ROW_ALIGN))
        grid_n = pl.cdiv(rows, blk)
    rows_padded = grid_n * blk                # every block full (mask-only padding)

    # Keep probability quantized to 2^-16: keep iff 16 random bits >= threshold.
    threshold = int(round(float(p) * 65536.0))
    scale = jnp.float32(1.0 / (1.0 - float(p)))
    kernel = functools.partial(_dropout_mask_kernel, threshold=threshold)

    seed_arr = jnp.asarray(seed, dtype=jnp.int32).reshape((1,))

    mask = pl.pallas_call(
        kernel,
        out_shape=jax.ShapeDtypeStruct((rows_padded, _LANE), jnp.int8),
        grid_spec=pltpu.PrefetchScalarGridSpec(
            num_scalar_prefetch=1,
            grid=(grid_n,),
            in_specs=[],
            out_specs=pl.BlockSpec((blk, _LANE), lambda i, seed: (i, 0)),
        ),
        compiler_params=pltpu.CompilerParams(
            dimension_semantics=("parallel",),
            vmem_limit_bytes=_VMEM_LIMIT),
    )(seed_arr)

    # Apply the masks outside the kernel: XLA fuses split + where + recombine
    # into one elementwise pass over x (plus a 1-byte mask read per element).
    m = mask.reshape(-1)[:total].reshape(orig_shape)
    keep_r = (m & 1) != 0
    keep_i = (m & 2) != 0
    xr = jnp.real(x)
    xi = jnp.imag(x)
    out_r = jnp.where(keep_r, xr * scale, jnp.float32(0.0))
    out_i = jnp.where(keep_i, xi * scale, jnp.float32(0.0))
    return lax.complex(out_r, out_i).astype(jnp.complex64)


if __name__ == "__main__":
    key = jax.random.PRNGKey(0)
    kr, ki = jax.random.split(key)
    shape = (2, 4, 16, 16)  # NCHW-style demo input
    x = (jax.random.normal(kr, shape, dtype=jnp.float32)
         + 1j * jax.random.normal(ki, shape, dtype=jnp.float32)).astype(jnp.complex64)

    p = 0.5
    y = jax.block_until_ready(complex_dropout(x, p=p, seed=1234, training=True))

    # Sanity checks: dtype/shape preserved; every entry is either 0 or x/(1-p);
    # drop fraction is roughly p; real / imag masks are independent (differ).
    assert y.shape == x.shape and y.dtype == jnp.complex64
    yr, yi = jnp.real(y), jnp.imag(y)
    xr, xi = jnp.real(x), jnp.imag(x)
    scale = 1.0 / (1.0 - p)
    zr = jnp.abs(yr) < 1e-6
    zi = jnp.abs(yi) < 1e-6
    assert bool(jnp.all(zr | (jnp.abs(yr - xr * scale) < 1e-4)))
    assert bool(jnp.all(zi | (jnp.abs(yi - xi * scale) < 1e-4)))
    fr = float(jnp.mean(zr.astype(jnp.float32)))
    fi = float(jnp.mean(zi.astype(jnp.float32)))
    assert 0.35 < fr < 0.65 and 0.35 < fi < 0.65
    assert bool(jnp.any(zr != zi))

    # Multi-block path: rows > 64 -> grid has several steps (megacore-shardable).
    big_shape = (8, 4, 64, 64)
    xb = (jax.random.normal(kr, big_shape, dtype=jnp.float32)
          + 1j * jax.random.normal(ki, big_shape, dtype=jnp.float32)).astype(jnp.complex64)
    yb = jax.block_until_ready(complex_dropout(xb, p=0.25, seed=7, training=True))
    assert yb.shape == big_shape and yb.dtype == jnp.complex64
    fb_r = float(jnp.mean((jnp.abs(jnp.real(yb)) < 1e-6).astype(jnp.float32)))
    fb_i = float(jnp.mean((jnp.abs(jnp.imag(yb)) < 1e-6).astype(jnp.float32)))
    assert 0.20 < fb_r < 0.30 and 0.20 < fb_i < 0.30

    # eval / identity path and p=1 all-zero path
    y_eval = jax.block_until_ready(complex_dropout(x, p=p, training=False))
    assert jnp.allclose(y_eval, x)
    y_p1 = jax.block_until_ready(complex_dropout(x, p=1.0, seed=7, training=True))
    assert bool(jnp.all(y_p1 == 0))

    print("KERNEL_OK")
</pallas_src>

<mosaic_0001>
module attributes {stable_mosaic.version = 11 : i64} {
  func.func @_dropout_mask_kernel(%arg0: i32, %arg1: memref<1xi32, #tpu.memory_space<smem>>, %arg2: memref<32x128xi8, #tpu.memory_space<vmem>>) attributes {dimension_semantics = [#tpu.dimension_semantics<parallel>], iteration_bounds = array<i64: 1>, scalar_prefetch = 1 : i64, scratch_operands = 0 : i64, tpu.core_type = #tpu.core_type<tc>, window_params = [{transform_indices = @transform_0, window_bounds = array<i64: 32, 128>}]} {
    %c4096_i32 = arith.constant 4096 : i32
    %0 = arith.muli %arg0, %c4096_i32 : i32
    %1 = tpu.iota {dimensions = array<i32: 0>} : vector<32x128xi32>
    %c128_i32 = arith.constant 128 : i32
    %2 = vector.broadcast %c128_i32 : i32 to vector<32x128xi32>
    %3 = arith.muli %1, %2 : vector<32x128xi32>
    %4 = vector.broadcast %0 : i32 to vector<32x128xi32>
    %5 = arith.addi %4, %3 : vector<32x128xi32>
    %6 = tpu.iota {dimensions = array<i32: 1>} : vector<32x128xi32>
    %7 = arith.addi %5, %6 : vector<32x128xi32>
    %c0 = arith.constant 0 : index
    %8 = memref.load %arg1[%c0] : memref<1xi32, #tpu.memory_space<smem>>
    %c-1640531535_i32 = arith.constant -1640531535 : i32
    %9 = arith.muli %8, %c-1640531535_i32 : i32
    %10 = vector.broadcast %9 : i32 to vector<32x128xi32>
    %11 = arith.xori %7, %10 : vector<32x128xi32>
    %12 = tpu.bitcast %11 : vector<32x128xi32> -> vector<32x128xi32>
    %c16_i32 = arith.constant 16 : i32
    %13 = vector.broadcast %c16_i32 : i32 to vector<32x128xi32>
    %14 = arith.shrui %12, %13 : vector<32x128xi32>
    %15 = arith.xori %12, %14 : vector<32x128xi32>
    %c-2048144789_i32 = arith.constant -2048144789 : i32
    %16 = vector.broadcast %c-2048144789_i32 : i32 to vector<32x128xi32>
    %17 = arith.muli %15, %16 : vector<32x128xi32>
    %c13_i32 = arith.constant 13 : i32
    %18 = vector.broadcast %c13_i32 : i32 to vector<32x128xi32>
    %19 = arith.shrui %17, %18 : vector<32x128xi32>
    %20 = arith.xori %17, %19 : vector<32x128xi32>
    %c-1028477387_i32 = arith.constant -1028477387 : i32
    %21 = vector.broadcast %c-1028477387_i32 : i32 to vector<32x128xi32>
    %22 = arith.muli %20, %21 : vector<32x128xi32>
    %c16_i32_0 = arith.constant 16 : i32
    %23 = vector.broadcast %c16_i32_0 : i32 to vector<32x128xi32>
    %24 = arith.shrui %22, %23 : vector<32x128xi32>
    %25 = arith.xori %22, %24 : vector<32x128xi32>
    %c16_i32_1 = arith.constant 16 : i32
    %26 = vector.broadcast %c16_i32_1 : i32 to vector<32x128xi32>
    %27 = arith.shrui %25, %26 : vector<32x128xi32>
    %28 = tpu.bitcast %27 : vector<32x128xi32> -> vector<32x128xi32>
    %c65535_i32 = arith.constant 65535 : i32
    %29 = vector.broadcast %c65535_i32 : i32 to vector<32x128xi32>
    %30 = arith.andi %25, %29 : vector<32x128xi32>
    %31 = tpu.bitcast %30 : vector<32x128xi32> -> vector<32x128xi32>
    %c32768_i32 = arith.constant 32768 : i32
    %32 = vector.broadcast %c32768_i32 : i32 to vector<32x128xi32>
    %33 = arith.cmpi sge, %28, %32 : vector<32x128xi32>
    %c32768_i32_2 = arith.constant 32768 : i32
    %34 = vector.broadcast %c32768_i32_2 : i32 to vector<32x128xi32>
    %35 = arith.cmpi sge, %31, %34 : vector<32x128xi32>
    %c1_i32 = arith.constant 1 : i32
    %c0_i32 = arith.constant 0 : i32
    %36 = vector.broadcast %c1_i32 : i32 to vector<32x128xi32>
    %37 = vector.broadcast %c0_i32 : i32 to vector<32x128xi32>
    %38 = arith.select %33, %36, %37 : vector<32x128xi1>, vector<32x128xi32>
    %c2_i32 = arith.constant 2 : i32
    %c0_i32_3 = arith.constant 0 : i32
    %39 = vector.broadcast %c2_i32 : i32 to vector<32x128xi32>
    %40 = vector.broadcast %c0_i32_3 : i32 to vector<32x128xi32>
    %41 = arith.select %35, %39, %40 : vector<32x128xi1>, vector<32x128xi32>
    %42 = arith.addi %38, %41 : vector<32x128xi32>
    %43 = arith.trunci %42 : vector<32x128xi32> to vector<32x128xi8>
    %c0_4 = arith.constant 0 : index
    %c0_5 = arith.constant 0 : index
    %44 = vector.load %arg2[%c0_4, %c0_5] : memref<32x128xi8, #tpu.memory_space<vmem>>, vector<32x128xi8>
    tpu.vector_store %arg2[%c0_4, %c0_5], %43 {strides = array<i32>} : memref<32x128xi8, #tpu.memory_space<vmem>>, vector<32x128xi8>,
    return
  }
  func.func @transform_0(%arg0: i32, %arg1: memref<1xi32, #tpu.memory_space<smem>>) -> (i32, i32) {
    %c0_i32 = arith.constant 0 : i32
    %c0_i32_0 = arith.constant 0 : i32
    return %arg0, %c0_i32 : i32, i32
  }
}

</mosaic_0001>

<llo_original>
// kernel: custom-call.1
$region0: #{custom-call.1}
  %s0 = inlined_call_operand.hbm [shape: c64[2,4,16,16], index: 0, kind: input, shape index: {}]
  %s1 = inlined_call_operand.vmem [shape: f32[2,4,16,16], index: 1, kind: output, shape index: {}]
  %s2 = scalar_lea.hbm %s0, 2048
  $region1: #{custom-call.1} parent=0
    #allocation0 [shape = 's32[1]{0}', space=sflag, size = 0x4, scoped, tag = 'scoped memory for custom-call.1']
    %3 = vsyncpa [#allocation0], 0
    %s4 = sshll.u32 %s1, 4
    %s5 = int_to_ptr.vmem [resolvable:$true] %s4
    %7 = dma.hbm_to_vmem [thread:$0]  %s2, 2048, %s5, [#allocation0]
    %8 = dma.done [#allocation0], 2048
    %9 = vsyncpa [#allocation0], 1

// kernel: custom-call
$region0: #{custom-call}
  %s0 = inlined_call_operand.hbm [shape: c64[2,4,16,16], index: 0, kind: input, shape index: {}]
  %s1 = inlined_call_operand.vmem [shape: f32[2,4,16,16], index: 1, kind: output, shape index: {}]
  $region1: #{custom-call} parent=0
    #allocation0 [shape = 's32[1]{0}', space=sflag, size = 0x4, scoped, tag = 'scoped memory for custom-call']
    %2 = vsyncpa [#allocation0], 0
    %s3 = sshll.u32 %s1, 4
    %s4 = int_to_ptr.vmem [resolvable:$true] %s3
    %6 = dma.hbm_to_vmem [thread:$0]  %s0, 2048, %s4, [#allocation0]
    %7 = dma.done [#allocation0], 2048
    %8 = vsyncpa [#allocation0], 1

// kernel: custom-call.2
$region0: #{custom-call.2}
  %s0 = inlined_call_operand.vmem [shape: f32[2,4,16,16], index: 0, kind: input, shape index: {}]
  %s1 = inlined_call_operand.vmem [shape: f32[2,4,16,16], index: 1, kind: input, shape index: {}]
  %s2 = inlined_call_operand.hbm [shape: c64[2,4,16,16], index: 2, kind: output, shape index: {}]
  %s3 = scalar_lea.hbm %s2, 2048
  $region1: #{custom-call.2} parent=0
    #allocation0 [shape = 's32[1]{0}', space=sflag, size = 0x4, scoped, tag = 'scoped memory for custom-call.2']
    %4 = vsyncpa [#allocation0], 0
    %s5 = sshll.u32 %s0, 4
    %s6 = int_to_ptr.vmem [resolvable:$true] %s5
    %8 = dma.vmem_to_hbm [thread:$0]  %s6, 2048, %s2, [#allocation0]
    %9 = dma.done [#allocation0], 2048
    %10 = vsyncpa [#allocation0], 1
  $region2: #{custom-call.2} parent=0
    #allocation1 [shape = 's32[1]{0}', space=sflag, size = 0x4, scoped, tag = 'scoped memory for custom-call.2']
    %11 = vsyncpa [#allocation1], 0
    %s12 = sshll.u32 %s1, 4
    %s13 = int_to_ptr.vmem [resolvable:$true] %s12
    %15 = dma.vmem_to_hbm [thread:$0]  %s13, 2048, %s3, [#allocation1]
    %16 = dma.done [#allocation1], 2048
    %17 = vsyncpa [#allocation1], 1

// kernel: complex_dropout.1
$region0: #{complex_dropout.1}
  #allocation0 [shape = 'u32[]', space=smem, size = 0x4, offset = 0x4, fixed_abs, tag = 'smem constant byte address 0x4 - core index']
  #allocation1 [shape = 'u32[144,128]{1,0:T(1,128)}', space=vmem, size = 0x12000, scoped, tag = 'internal scratch']
  #allocation2 [shape = 's32[1]{0}', space=sflag, size = 0x4, scoped, tag = 'scoped memory for complex_dropout.1']
  #allocation3 [shape = 's32[1]{0:T(128)S(6)}', space=smem, size = 0x200, scoped, tag = 'prefetched SMEM operand 0']
  %s0 = inlined_call_operand.<no memory space> [shape: s32[1], index: 0, kind: input, shape index: {}]
  %s1 = inlined_call_operand.vmem [shape: s8[32,128], index: 1, kind: output, shape index: {}]
  %s2 = sld [smem:[#allocation0]]
  $region10: #{complex_dropout.1} parent=0
    _
  %s4 = ssub.s32 1, %s2
  %s5 = scalar_select 0, %s4, %s2
  %6 = sst [smem:[#allocation3]] %s0
  %s7 = smul.u32 0, 4096
  %v8 = vlaneseq
  %v9 = vshrl.u32 %v8, 7
  %v10 = vadd.s32 %v9, 8
  %v11 = vadd.s32 %v9, 16
  %v12 = vadd.s32 %v9, 24
  %v13 = vmul.u32 %v9, 128
  %v14 = vmul.u32 %v10, 128
  %v15 = vmul.u32 %v11, 128
  %v16 = vmul.u32 %v12, 128
  %v17 = vstv %s7
  %v18 = vadd.s32 %v17, %v13
  %v19 = vadd.s32 %v17, %v14
  %v20 = vadd.s32 %v17, %v15
  %v21 = vadd.s32 %v17, %v16
  %v22 = vlaneseq
  %v23 = vand.u32 %v22, 127
  %v24 = vadd.s32 %v18, %v23
  %v25 = vadd.s32 %v19, %v23
  %v26 = vadd.s32 %v20, %v23
  %v27 = vadd.s32 %v21, %v23
  %s28 = sld [smem:[#allocation3]]
  %s29 = smul.u32 %s28, 2654435761
  %v30 = vstv %s29
  %v31 = vxor.u32 %v24, %v30
  %v32 = vxor.u32 %v25, %v30
  %v33 = vxor.u32 %v26, %v30
  %v34 = vxor.u32 %v27, %v30
  %v35 = vshrl.u32 %v31, 16
  %v36 = vshrl.u32 %v32, 16
  %v37 = vshrl.u32 %v33, 16
  %v38 = vshrl.u32 %v34, 16
  %v39 = vxor.u32 %v31, %v35
  %v40 = vxor.u32 %v32, %v36
  %v41 = vxor.u32 %v33, %v37
  %v42 = vxor.u32 %v34, %v38
  %v43 = vmul.u32 %v39, 2246822507
  %v44 = vmul.u32 %v40, 2246822507
  %v45 = vmul.u32 %v41, 2246822507
  %v46 = vmul.u32 %v42, 2246822507
  %v47 = vshrl.u32 %v43, 13
  %v48 = vshrl.u32 %v44, 13
  %v49 = vshrl.u32 %v45, 13
  %v50 = vshrl.u32 %v46, 13
  %v51 = vxor.u32 %v43, %v47
  %v52 = vxor.u32 %v44, %v48
  %v53 = vxor.u32 %v45, %v49
  %v54 = vxor.u32 %v46, %v50
  %v55 = vmul.u32 %v51, 3266489909
  %v56 = vmul.u32 %v52, 3266489909
  %v57 = vmul.u32 %v53, 3266489909
  %v58 = vmul.u32 %v54, 3266489909
  %v59 = vshrl.u32 %v55, 16
  %v60 = vshrl.u32 %v56, 16
  %v61 = vshrl.u32 %v57, 16
  %v62 = vshrl.u32 %v58, 16
  %v63 = vxor.u32 %v55, %v59
  %v64 = vxor.u32 %v56, %v60
  %v65 = vxor.u32 %v57, %v61
  %v66 = vxor.u32 %v58, %v62
  %v67 = vshrl.u32 %v63, 16
  %v68 = vshrl.u32 %v64, 16
  %v69 = vshrl.u32 %v65, 16
  %v70 = vshrl.u32 %v66, 16
  %v71 = vand.u32 %v63, 65535
  %v72 = vand.u32 %v64, 65535
  %v73 = vand.u32 %v65, 65535
  %v74 = vand.u32 %v66, 65535
  %vm75 = vcmp.ge.s32.totalorder %v67, 32768
  %vm76 = vcmp.ge.s32.totalorder %v68, 32768
  %vm77 = vcmp.ge.s32.totalorder %v69, 32768
  %vm78 = vcmp.ge.s32.totalorder %v70, 32768
  %vm79 = vcmp.ge.s32.totalorder %v71, 32768
  %vm80 = vcmp.ge.s32.totalorder %v72, 32768
  %vm81 = vcmp.ge.s32.totalorder %v73, 32768
  %vm82 = vcmp.ge.s32.totalorder %v74, 32768
  %v83 = vsel %vm75, 1, 0
  %v84 = vsel %vm76, 1, 0
  %v85 = vsel %vm77, 1, 0
  %v86 = vsel %vm78, 1, 0
  %v87 = vsel %vm79, 2, 0
  %v88 = vsel %vm80, 2, 0
  %v89 = vsel %vm81, 2, 0
  %v90 = vsel %vm82, 2, 0
  %v91 = vadd.s32 %v83, %v87
  %v92 = vadd.s32 %v84, %v88
  %v93 = vadd.s32 %v85, %v89
  %v94 = vadd.s32 %v86, %v90
  %v95 = vpack.c.b16 %v91, %v91
  %v96 = vpack.c.b8 %v95, %v95
  %v97 = vpack.c.b16 %v92, %v92
  %v98 = vpack.c.b8 %v97, %v97
  %v99 = vpack.c.b16 %v93, %v93
  %v100 = vpack.c.b8 %v99, %v99
  %v101 = vpack.c.b16 %v94, %v94
  %v102 = vpack.c.b8 %v101, %v101
  %103 = vst [vmem:[%s1] sm:$0x3] %v96
  %104 = vst [vmem:[%s1 + $0x2] sm:$0x3] %v98
  %105 = vst [vmem:[%s1 + $0x4] sm:$0x3] %v100
  %106 = vst [vmem:[%s1 + $0x6] sm:$0x3] %v102
  // Predicated region
  $region2: #{complex_dropout.1} parent=0 // pred_check
    _
  $region3: #{complex_dropout.1} parent=0 // pred_check_branch
    %108 = sbr.rel (0) target = $region5
  $region4: #{complex_dropout.1} parent=0 // pred_region
    _
  $region5: #{complex_dropout.1} parent=0 // pred_fallthru
    _
  // Predicated region
  $region6: #{complex_dropout.1} parent=0 // pred_check
    _
  $region7: #{complex_dropout.1} parent=0 // pred_check_branch
    %110 = sbr.rel (0) target = $region9
  $region8: #{complex_dropout.1} parent=0 // pred_region
    _
  $region9: #{complex_dropout.1} parent=0 // pred_fallthru
    _

</llo_original>
